<compile_context>
chip_gen: v6e
topology: v6e:2x2x1
jax: 0.10.0
libtpu: 0.0.40
codegen_flags: <defaults>
</compile_context>

<pallas_src>
import jax
import jax.numpy as jnp
from jax.experimental import pallas as pl
from jax.experimental.pallas import tpu as pltpu


def _leaky_relu(x, slope=0.2):
    return jnp.where(x >= 0, x, slope * x)


def _round_up(x, m):
    return ((x + m - 1) // m) * m


def _ceil_div(a, b):
    return -(-a // b)


# ------------------------------------------------------------- pass 1: fc1 --
def fc1_kernel(feat_ref, w1t_ref, b1_ref, src_ref):
    h = jnp.dot(feat_ref[...], w1t_ref[...],
                preferred_element_type=jnp.float32) + b1_ref[...]
    src_ref[...] = _leaky_relu(h).astype(src_ref.dtype)


# ------------------------------------- pass 2: aggregation + fc2 epilogue ---
def mpnn_agg_kernel(w_ref, src_ref, feat_ref, wa_ref, w2t_ref, b2_ref,
                    out_ref, acc_ref):
    k = pl.program_id(1)

    @pl.when(k == 0)
    def _():
        acc_ref[...] = jnp.zeros_like(acc_ref)

    # ft[v] += sum_u w[v,u] * feat_src[u]
    # Bare bf16 x bf16 -> f32 accumulate on the MXU; all per-edge weight math
    # (mask, belta/dist) was hoisted into the wrapper's pad/cast fusion.
    acc_ref[...] += jnp.dot(w_ref[...], src_ref[...],
                            preferred_element_type=jnp.float32)

    @pl.when(k == pl.num_programs(1) - 1)
    def _():
        feat = feat_ref[...]                                        # [tm, Fp] f32
        e = jnp.sum(feat * wa_ref[...], axis=-1, keepdims=True)     # attfc(feat)
        rst = acc_ref[...] + e * feat
        h2 = jnp.dot(rst, w2t_ref[...],
                     preferred_element_type=jnp.float32) + b2_ref[...]
        out_ref[...] = _leaky_relu(h2).astype(out_ref.dtype)


def mpnn_forward(feat, dist, w1, b1, w2, b2, wa, belta):
    N, F = feat.shape
    f32 = jnp.float32
    Fp = _round_up(max(F, 128), 128)          # lane-dense feature dim

    # ---- tile plan ---------------------------------------------------------
    # Row (output) tiles: cap at 1024 rows, but always >= 2 tiles once N > 256
    # so the "parallel" axis keeps both v7x TensorCores busy; row padding is
    # only up to the next multiple of 8 per tile -> minimal waste.
    n_m = max(2 if N > 256 else 1, _ceil_div(N, 1024))
    tm = _round_up(_ceil_div(N, n_m), 8)
    row_pad = _round_up(N, tm)
    # Source (reduction) tiles: ~2048 columns per k step (amortizes the
    # ~0.35 us per-grid-step overhead), 128-aligned, sized by evenly splitting
    # N so column padding stays small.
    n_k = max(1, _ceil_div(N, 2048))
    tk = _round_up(_ceil_div(N, n_k), 128)
    col_pad = _round_up(N, tk)

    # ---- padded operands ---------------------------------------------------
    feat32 = feat.astype(f32)
    feat_rows = jnp.zeros((row_pad, Fp), f32).at[:N, :F].set(feat32)
    if col_pad == row_pad:
        feat_cols = feat_rows
    else:
        feat_cols = jnp.zeros((col_pad, Fp), f32).at[:N, :F].set(feat32)

    # Per-edge weight precomputed here (fuses into the padded bf16 copy we
    # materialize anyway): f32 division, masked where dist == 0 (no edge),
    # rounded to bf16 once at the very end.
    dist32 = dist.astype(f32)
    has_edge = dist32 > 0.0
    belta0 = belta.reshape(-1)[0].astype(f32)
    w_edge = jnp.where(has_edge, belta0 / jnp.where(has_edge, dist32, 1.0), 0.0)
    weight_bf = (jnp.zeros((row_pad, col_pad), jnp.bfloat16)
                 .at[:N, :N].set(w_edge.astype(jnp.bfloat16)))

    w1t = jnp.zeros((Fp, Fp), f32).at[:F, :F].set(w1.T.astype(f32))
    b1p = jnp.zeros((1, Fp), f32).at[0, :F].set(b1.astype(f32))
    w2t = jnp.zeros((Fp, Fp), f32).at[:F, :F].set(w2.T.astype(f32))
    b2p = jnp.zeros((1, Fp), f32).at[0, :F].set(b2.astype(f32))
    wap = jnp.zeros((1, Fp), f32).at[0, :F].set(wa.reshape(-1).astype(f32))

    # ---- pass 1: feat_src = leaky_relu(feat @ w1.T + b1), stored bf16 -------
    feat_src = pl.pallas_call(
        fc1_kernel,
        out_shape=jax.ShapeDtypeStruct((col_pad, Fp), jnp.bfloat16),
        grid=(col_pad // tk,),
        in_specs=[
            pl.BlockSpec((tk, Fp), lambda i: (i, 0)),
            pl.BlockSpec((Fp, Fp), lambda i: (0, 0)),
            pl.BlockSpec((1, Fp), lambda i: (0, 0)),
        ],
        out_specs=pl.BlockSpec((tk, Fp), lambda i: (i, 0)),
        compiler_params=pltpu.CompilerParams(
            dimension_semantics=("parallel",),
            vmem_limit_bytes=48 * 1024 * 1024,
        ),
    )(feat_cols, w1t, b1p)

    # ---- pass 2: stream bf16 edge weights over (row-tile i, source-tile k) --
    # ~12 MiB VMEM at the largest tiles (tm=1024, tk=2048): weight 2x4 MiB
    # double-buffered + feat_src/feat/out/acc, well inside 48 MiB everywhere.
    # NOTE: pipeline_mode=pl.Buffered(3) on the weight spec is a cheap follow-up
    # if profiling shows exposed DMA between k steps.
    out = pl.pallas_call(
        mpnn_agg_kernel,
        out_shape=jax.ShapeDtypeStruct((row_pad, Fp), f32),
        grid=(row_pad // tm, col_pad // tk),
        in_specs=[
            pl.BlockSpec((tm, tk), lambda i, k: (i, k)),     # edge weights (bf16, streamed)
            pl.BlockSpec((tk, Fp), lambda i, k: (k, 0)),     # feat_src (bf16)
            pl.BlockSpec((tm, Fp), lambda i, k: (i, 0)),     # feat (per-i resident)
            pl.BlockSpec((1, Fp), lambda i, k: (0, 0)),      # attfc weight (resident)
            pl.BlockSpec((Fp, Fp), lambda i, k: (0, 0)),     # w2.T (resident)
            pl.BlockSpec((1, Fp), lambda i, k: (0, 0)),      # b2 (resident)
        ],
        out_specs=pl.BlockSpec((tm, Fp), lambda i, k: (i, 0)),
        scratch_shapes=[pltpu.VMEM((tm, Fp), f32)],
        compiler_params=pltpu.CompilerParams(
            dimension_semantics=("parallel", "arbitrary"),
            vmem_limit_bytes=48 * 1024 * 1024,
        ),
    )(weight_bf, feat_src, feat_rows, wap, w2t, b2p)

    return out[:N, :F]


def mpnn_reference(feat, dist, w1, b1, w2, b2, wa, belta):
    feat_src = _leaky_relu(feat @ w1.T + b1)
    has_edge = dist > 0.0
    w = jnp.where(has_edge, belta[0] / jnp.where(has_edge, dist, 1.0), 0.0)
    ft = w @ feat_src
    e = feat @ wa.reshape(-1, 1)
    rst = ft + e * feat
    return _leaky_relu(rst @ w2.T + b2)


if __name__ == "__main__":
    def make_case(key, N, F):
        k_feat, k_mask, k_dist, k_w1, k_b1, k_w2, k_b2, k_wa = jax.random.split(key, 8)
        feat = jax.random.normal(k_feat, (N, F), dtype=jnp.float32)
        edge_mask = jax.random.uniform(k_mask, (N, N)) < 0.5
        distances = jax.random.uniform(k_dist, (N, N), minval=0.5, maxval=2.0)
        dist = jnp.where(edge_mask, distances, 0.0).astype(jnp.float32)
        s = 1.0 / jnp.sqrt(F)
        w1 = jax.random.uniform(k_w1, (F, F), minval=-s, maxval=s, dtype=jnp.float32)
        b1 = jax.random.uniform(k_b1, (F,), minval=-s, maxval=s, dtype=jnp.float32)
        w2 = jax.random.uniform(k_w2, (F, F), minval=-s, maxval=s, dtype=jnp.float32)
        b2 = jax.random.uniform(k_b2, (F,), minval=-s, maxval=s, dtype=jnp.float32)
        wa = jax.random.uniform(k_wa, (F,), minval=-s, maxval=s, dtype=jnp.float32)
        belta = jnp.array([0.5], dtype=jnp.float32)
        return feat, dist, w1, b1, w2, b2, wa, belta

    # Tiny case matching the original module sizes (in_features == out_features).
    args = make_case(jax.random.PRNGKey(0), 8, 32)
    out = jax.block_until_ready(mpnn_forward(*args))
    ref = mpnn_reference(*args)
    assert out.shape == (8, 32)
    # bf16 edge weights / feat_src -> looser tolerance than pure f32.
    assert jnp.allclose(out, ref, atol=1e-1, rtol=5e-2), "small case mismatch vs reference"

    # Medium case that exercises the (row-tile, source-tile) grid, the
    # accumulator init/finalize and the streamed bf16 weight path.
    args_m = make_case(jax.random.PRNGKey(1), 640, 32)
    out_m = jax.block_until_ready(mpnn_forward(*args_m))
    ref_m = mpnn_reference(*args_m)
    assert out_m.shape == (640, 32)
    assert jnp.allclose(out_m, ref_m, atol=2e-1, rtol=5e-2), "medium case mismatch vs reference"

    print("KERNEL_OK")
</pallas_src>

<mosaic_0001>
module attributes {stable_mosaic.version = 11 : i64} {
  func.func @fc1_kernel(%arg0: i32, %arg1: memref<128x128xf32, #tpu.memory_space<vmem>>, %arg2: memref<128x128xf32, #tpu.memory_space<vmem>>, %arg3: memref<1x128xf32, #tpu.memory_space<vmem>>, %arg4: memref<128x128xbf16, #tpu.memory_space<vmem>>) attributes {dimension_semantics = [#tpu.dimension_semantics<parallel>], iteration_bounds = array<i64: 1>, scalar_prefetch = 0 : i64, scratch_operands = 0 : i64, tpu.core_type = #tpu.core_type<tc>, window_params = [{transform_indices = @transform_0, window_bounds = array<i64: 128, 128>}, {pipeline_mode = #tpu.pipeline_mode<synchronous>, transform_indices = @transform_1, window_bounds = array<i64: 128, 128>}, {pipeline_mode = #tpu.pipeline_mode<synchronous>, transform_indices = @transform_2, window_bounds = array<i64: 1, 128>}, {transform_indices = @transform_3, window_bounds = array<i64: 128, 128>}]} {
    %c0 = arith.constant 0 : index
    %c0_0 = arith.constant 0 : index
    %0 = vector.load %arg1[%c0, %c0_0] : memref<128x128xf32, #tpu.memory_space<vmem>>, vector<128x128xf32>
    %c0_1 = arith.constant 0 : index
    %c0_2 = arith.constant 0 : index
    %1 = vector.load %arg2[%c0_1, %c0_2] : memref<128x128xf32, #tpu.memory_space<vmem>>, vector<128x128xf32>
    %cst = arith.constant dense<0.000000e+00> : vector<128x128xf32>
    %2 = tpu.matmul %0, %1, %cst {dimension_numbers = #tpu.dot_dimension_numbers<[1], [0], [0], [1], [0, 0, 1, 1], [], []>} : vector<128x128xf32>, vector<128x128xf32>, vector<128x128xf32> -> vector<128x128xf32>
    %c0_3 = arith.constant 0 : index
    %c0_4 = arith.constant 0 : index
    %3 = vector.load %arg3[%c0_3, %c0_4] : memref<1x128xf32, #tpu.memory_space<vmem>>, vector<1x128xf32>
    %4 = vector.broadcast %3 : vector<1x128xf32> to vector<128x128xf32>
    %5 = arith.addf %2, %4 : vector<128x128xf32>
    %cst_5 = arith.constant 0.000000e+00 : f32
    %6 = vector.broadcast %cst_5 : f32 to vector<128x128xf32>
    %7 = arith.cmpf oge, %5, %6 : vector<128x128xf32>
    %cst_6 = arith.constant 2.000000e-01 : f32
    %8 = vector.broadcast %cst_6 : f32 to vector<128x128xf32>
    %9 = arith.mulf %8, %5 : vector<128x128xf32>
    %10 = arith.select %7, %5, %9 : vector<128x128xi1>, vector<128x128xf32>
    %11 = arith.truncf %10 : vector<128x128xf32> to vector<128x128xbf16>
    %c0_7 = arith.constant 0 : index
    %c0_8 = arith.constant 0 : index
    %12 = vector.load %arg4[%c0_7, %c0_8] : memref<128x128xbf16, #tpu.memory_space<vmem>>, vector<128x128xbf16>
    tpu.vector_store %arg4[%c0_7, %c0_8], %11 {strides = array<i32>} : memref<128x128xbf16, #tpu.memory_space<vmem>>, vector<128x128xbf16>,
    return
  }
  func.func @transform_0(%arg0: i32) -> (i32, i32) {
    %c0_i32 = arith.constant 0 : i32
    %c0_i32_0 = arith.constant 0 : i32
    return %arg0, %c0_i32 : i32, i32
  }
  func.func @transform_1(%arg0: i32) -> (i32, i32) {
    %c0_i32 = arith.constant 0 : i32
    %c0_i32_0 = arith.constant 0 : i32
    %c0_i32_1 = arith.constant 0 : i32
    return %c0_i32, %c0_i32_0 : i32, i32
  }
  func.func @transform_2(%arg0: i32) -> (i32, i32) {
    %c0_i32 = arith.constant 0 : i32
    %c0_i32_0 = arith.constant 0 : i32
    %c0_i32_1 = arith.constant 0 : i32
    return %c0_i32, %c0_i32_0 : i32, i32
  }
  func.func @transform_3(%arg0: i32) -> (i32, i32) {
    %c0_i32 = arith.constant 0 : i32
    %c0_i32_0 = arith.constant 0 : i32
    return %arg0, %c0_i32 : i32, i32
  }
}

</mosaic_0001>

<llo_original>
// kernel: tpu_custom_call.1
$region0: #{tpu_custom_call.1}
  #allocation0 [shape = 'u32[]', space=smem, size = 0x4, offset = 0x4, fixed_abs, tag = 'smem constant byte address 0x4 - core index']
  #allocation1 [shape = 'u32[144,128]{1,0:T(1,128)}', space=vmem, size = 0x12000, scoped, tag = 'internal scratch']
  %s0 = inlined_call_operand.hbm [shape: f32[128,128], index: 0, kind: input, shape index: {}]
  %s1 = inlined_call_operand.hbm [shape: f32[128,128], index: 1, kind: input, shape index: {}]
  %s2 = inlined_call_operand.vmem [shape: f32[1,128], index: 2, kind: input, shape index: {}]
  %s3 = inlined_call_operand.hbm [shape: bf16[128,128], index: 3, kind: output, shape index: {}]
  %s4 = sld [smem:[#allocation0]]
  $region30: #{tpu_custom_call.1} parent=0
    _
  %s6 = ssub.s32 1, %s4
  %s7 = scalar_select 0, %s6, %s4
  $region1: #{tpu_custom_call.1} parent=0
    #allocation2 [shape = 'u8[65536]{0}', space=vmem, size = 0x10000, scoped, tag = 'input window, operand 0, single buffered']
    #allocation3 [shape = 's32[1]{0}', space=sflag, size = 0x4, scoped, tag = 'scoped memory for tpu_custom_call.1']
    #allocation4 [shape = 's32[1]{0}', space=sflag, size = 0x4, scoped, tag = 'scoped memory for tpu_custom_call.1']
    #allocation5 [shape = 'u8[65536]{0}', space=vmem, size = 0x10000, scoped, tag = 'input window, operand 1, single buffered']
    #allocation6 [shape = 's32[1]{0}', space=sflag, size = 0x4, scoped, tag = 'scoped memory for tpu_custom_call.1']
    #allocation7 [shape = 'u8[32768]{0}', space=vmem, size = 0x8000, scoped, tag = 'output window, operand 0, single buffered']
    %8 = vsyncpa [#allocation3], 0
    %9 = vsyncpa [#allocation6], 0
    %10 = vsyncpa [#allocation4], 0
    // Predicated region
    $region2: #{tpu_custom_call.1} parent=1 // pred_check
      _
    $region3: #{tpu_custom_call.1} parent=1 // pred_check_branch
      %12 = sbr.rel (0) target = $region5
    $region4: #{tpu_custom_call.1} parent=1 // pred_region
      %s14 = ssub.s32 2048, 2048
      %15 = vsyncadd [#allocation3], %s14
      %s16 = sshll.u32 [#allocation2], 4
      %s17 = int_to_ptr.vmem [resolvable:$true] %s16
      %22 = dma.hbm_to_vmem [thread:$0]  %s0, 2048, %s17, [#allocation3], 128, 128, 8
    $region5: #{tpu_custom_call.1} parent=1 // pred_fallthru
      _
    // Predicated region
    $region6: #{tpu_custom_call.1} parent=1 // pred_check
      _
    $region7: #{tpu_custom_call.1} parent=1 // pred_check_branch
      %24 = sbr.rel (0) target = $region9
    $region8: #{tpu_custom_call.1} parent=1 // pred_region
      %s26 = ssub.s32 2048, 2048
      %27 = vsyncadd [#allocation6], %s26
      %s28 = sshll.u32 [#allocation5], 4
      %s29 = int_to_ptr.vmem [resolvable:$true] %s28
      %34 = dma.hbm_to_vmem [thread:$0]  %s1, 2048, %s29, [#allocation6], 128, 128, 8
    $region9: #{tpu_custom_call.1} parent=1 // pred_fallthru
      _
    // Predicated region
    $region10: #{tpu_custom_call.1} parent=1 // pred_check
      _
    $region11: #{tpu_custom_call.1} parent=1 // pred_check_branch
      %36 = sbr.rel (0) target = $region13
    $region12: #{tpu_custom_call.1} parent=1 // pred_region
      _
    $region13: #{tpu_custom_call.1} parent=1 // pred_fallthru
      _
    // Predicated region
    $region14: #{tpu_custom_call.1} parent=1 // pred_check
      _
    $region15: #{tpu_custom_call.1} parent=1 // pred_check_branch
      %38 = sbr.rel (0) target = $region17
    $region16: #{tpu_custom_call.1} parent=1 // pred_region
      %39 = dma.done [#allocation3], 2048
    $region17: #{tpu_custom_call.1} parent=1 // pred_fallthru
      _
    // Predicated region
    $region18: #{tpu_custom_call.1} parent=1 // pred_check
      _
    $region19: #{tpu_custom_call.1} parent=1 // pred_check_branch
      %41 = sbr.rel (0) target = $region21
    $region20: #{tpu_custom_call.1} parent=1 // pred_region
      %42 = dma.done [#allocation6], 2048
    $region21: #{tpu_custom_call.1} parent=1 // pred_fallthru
      _
    %v43 = vld [vmem:[#allocation2] sm:$0xff]
    %v44 = vld [vmem:[#allocation2 + $0x8] sm:$0xff]
    %v45 = vld [vmem:[#allocation2 + $0x10] sm:$0xff]
    %v46 = vld [vmem:[#allocation2 + $0x18] sm:$0xff]
    %v47 = vld [vmem:[#allocation2 + $0x20] sm:$0xff]
    %v48 = vld [vmem:[#allocation2 + $0x28] sm:$0xff]
    %v49 = vld [vmem:[#allocation2 + $0x30] sm:$0xff]
    %v50 = vld [vmem:[#allocation2 + $0x38] sm:$0xff]
    %v51 = vld [vmem:[#allocation2 + $0x40] sm:$0xff]
    %v52 = vld [vmem:[#allocation2 + $0x48] sm:$0xff]
    %v53 = vld [vmem:[#allocation2 + $0x50] sm:$0xff]
    %v54 = vld [vmem:[#allocation2 + $0x58] sm:$0xff]
    %v55 = vld [vmem:[#allocation2 + $0x60] sm:$0xff]
    %v56 = vld [vmem:[#allocation2 + $0x68] sm:$0xff]
    %v57 = vld [vmem:[#allocation2 + $0x70] sm:$0xff]
    %v58 = vld [vmem:[#allocation2 + $0x78] sm:$0xff]
    %v59 = vld [vmem:[#allocation5] sm:$0xff]
    %v60 = vld [vmem:[#allocation5 + $0x8] sm:$0xff]
    %v61 = vld [vmem:[#allocation5 + $0x10] sm:$0xff]
    %v62 = vld [vmem:[#allocation5 + $0x18] sm:$0xff]
    %v63 = vld [vmem:[#allocation5 + $0x20] sm:$0xff]
    %v64 = vld [vmem:[#allocation5 + $0x28] sm:$0xff]
    %v65 = vld [vmem:[#allocation5 + $0x30] sm:$0xff]
    %v66 = vld [vmem:[#allocation5 + $0x38] sm:$0xff]
    %v67 = vld [vmem:[#allocation5 + $0x40] sm:$0xff]
    %v68 = vld [vmem:[#allocation5 + $0x48] sm:$0xff]
    %v69 = vld [vmem:[#allocation5 + $0x50] sm:$0xff]
    %v70 = vld [vmem:[#allocation5 + $0x58] sm:$0xff]
    %v71 = vld [vmem:[#allocation5 + $0x60] sm:$0xff]
    %v72 = vld [vmem:[#allocation5 + $0x68] sm:$0xff]
    %v73 = vld [vmem:[#allocation5 + $0x70] sm:$0xff]
    %v74 = vld [vmem:[#allocation5 + $0x78] sm:$0xff]
    %v75 = vld [vmem:[%s2] sm:$0x1]
    %v77 = vlaneseq
    %v78 = vshrl.u32 %v77, 7
    %v79 = vsub.s32 0, %v78
    %v80 = vrot.slane %v75, %v79
    %82 = vmatprep.subr.mxu0 0.0
    %83 = vmatpush1.msra.mxu0 %v74
    %84 = vmatprep.subr.mxu0 0.0
    %85 = vmatpush1.msra.mxu0 %v73
    %86 = vmatprep.subr.mxu0 0.0
    %87 = vmatpush1.msra.mxu0 %v72
    %88 = vmatprep.subr.mxu0 0.0
    %89 = vmatpush1.msra.mxu0 %v71
    %90 = vmatprep.subr.mxu0 0.0
    %91 = vmatpush1.msra.mxu0 %v70
    %92 = vmatprep.subr.mxu0 0.0
    %93 = vmatpush1.msra.mxu0 %v69
    %94 = vmatprep.subr.mxu0 0.0
    %95 = vmatpush1.msra.mxu0 %v68
    %96 = vmatprep.subr.mxu0 0.0
    %97 = vmatpush1.msra.mxu0 %v67
    %98 = vmatprep.subr.mxu0 0.0
    %99 = vmatpush1.msra.mxu0 %v66
    %100 = vmatprep.subr.mxu0 0.0
    %101 = vmatpush1.msra.mxu0 %v65
    %102 = vmatprep.subr.mxu0 0.0
    %103 = vmatpush1.msra.mxu0 %v64
    %104 = vmatprep.subr.mxu0 0.0
    %105 = vmatpush1.msra.mxu0 %v63
    %106 = vmatprep.subr.mxu0 0.0
    %107 = vmatpush1.msra.mxu0 %v62
    %108 = vmatprep.subr.mxu0 0.0
    %109 = vmatpush1.msra.mxu0 %v61
    %110 = vmatprep.subr.mxu0 0.0
    %111 = vmatpush1.msra.mxu0 %v60
    %112 = vmatprep.subr.mxu0 0.0
    %113 = vmatpush1.msra.mxu0 %v59
    %114 = vmatprep.subr.mxu0 0.0
    %115 = vmatpush2.msra.mxu0 0.0
    %116 = vmatprep.subr.mxu0 0.0
    %117 = vmatpush2.msra.mxu0 0.0
    %118 = vmatprep.subr.mxu0 0.0
    %119 = vmatpush2.msra.mxu0 0.0
    %120 = vmatprep.subr.mxu0 0.0
    %121 = vmatpush2.msra.mxu0 0.0
    %122 = vmatprep.subr.mxu0 0.0
    %123 = vmatpush2.msra.mxu0 0.0
    %124 = vmatprep.subr.mxu0 0.0
    %125 = vmatpush2.msra.mxu0 0.0
    %126 = vmatprep.subr.mxu0 0.0
    %127 = vmatpush2.msra.mxu0 0.0
    %128 = vmatprep.subr.mxu0 0.0
    %129 = vmatpush2.msra.mxu0 0.0
    %130 = vmatprep.subr.mxu0 0.0
    %131 = vmatpush2.msra.mxu0 0.0
    %132 = vmatprep.subr.mxu0 0.0
    %133 = vmatpush2.msra.mxu0 0.0
    %134 = vmatprep.subr.mxu0 0.0
    %135 = vmatpush2.msra.mxu0 0.0
    %136 = vmatprep.subr.mxu0 0.0
    %137 = vmatpush2.msra.mxu0 0.0
    %138 = vmatprep.subr.mxu0 0.0
    %139 = vmatpush2.msra.mxu0 0.0
    %140 = vmatprep.subr.mxu0 0.0
    %141 = vmatpush2.msra.mxu0 0.0
    %142 = vmatprep.subr.mxu0 0.0
    %143 = vmatpush2.msra.mxu0 0.0
    %144 = vmatprep.subr.mxu0 0.0
    %145 = vmatpush2.msra.mxu0 0.0
    %146 = vmatprep.mubr.f32.mxu0 0.0
    %147 = vmatmul.mubr.f32.gmra.mxu0 %v43
    %v148 = vpop.f32.mrf.mxu0
    %v149 = vadd.f32 %v80, %v148
    %v150 = vpop.f32.mrf.mxu0
    %151 = vmatprep.mubr.f32.mxu0 0.0
    %152 = vmatmul.mubr.f32.gmra.mxu0 %v44
    %v153 = vpop.f32.mrf.mxu0
    %v154 = vadd.f32 %v80, %v153
    %v155 = vpop.f32.mrf.mxu0
    %156 = vmatprep.mubr.f32.mxu0 0.0
    %157 = vmatmul.mubr.f32.gmra.mxu0 %v45
    %v158 = vpop.f32.mrf.mxu0
    %v159 = vadd.f32 %v80, %v158
    %v160 = vpop.f32.mrf.mxu0
    %161 = vmatprep.mubr.f32.mxu0 0.0
    %162 = vmatmul.mubr.f32.gmra.mxu0 %v46
    %v163 = vpop.f32.mrf.mxu0
    %v164 = vadd.f32 %v80, %v163
    %v165 = vpop.f32.mrf.mxu0
    %166 = vmatprep.mubr.f32.mxu0 0.0
    %167 = vmatmul.mubr.f32.gmra.mxu0 %v47
    %v168 = vpop.f32.mrf.mxu0
    %v169 = vadd.f32 %v80, %v168
    %v170 = vpop.f32.mrf.mxu0
    %171 = vmatprep.mubr.f32.mxu0 0.0
    %172 = vmatmul.mubr.f32.gmra.mxu0 %v48
    %v173 = vpop.f32.mrf.mxu0
    %v174 = vadd.f32 %v80, %v173
    %v175 = vpop.f32.mrf.mxu0
    %176 = vmatprep.mubr.f32.mxu0 0.0
    %177 = vmatmul.mubr.f32.gmra.mxu0 %v49
    %v178 = vpop.f32.mrf.mxu0
    %v179 = vadd.f32 %v80, %v178
    %v180 = vpop.f32.mrf.mxu0
    %181 = vmatprep.mubr.f32.mxu0 0.0
    %182 = vmatmul.mubr.f32.gmra.mxu0 %v50
    %v183 = vpop.f32.mrf.mxu0
    %v184 = vadd.f32 %v80, %v183
    %v185 = vpop.f32.mrf.mxu0
    %186 = vmatprep.mubr.f32.mxu0 0.0
    %187 = vmatmul.mubr.f32.gmra.mxu0 %v51
    %v188 = vpop.f32.mrf.mxu0
    %v189 = vadd.f32 %v80, %v188
    %v190 = vpop.f32.mrf.mxu0
    %191 = vmatprep.mubr.f32.mxu0 0.0
    %192 = vmatmul.mubr.f32.gmra.mxu0 %v52
    %v193 = vpop.f32.mrf.mxu0
    %v194 = vadd.f32 %v80, %v193
    %v195 = vpop.f32.mrf.mxu0
    %196 = vmatprep.mubr.f32.mxu0 0.0
    %197 = vmatmul.mubr.f32.gmra.mxu0 %v53
    %v198 = vpop.f32.mrf.mxu0
    %v199 = vadd.f32 %v80, %v198
    %v200 = vpop.f32.mrf.mxu0
    %201 = vmatprep.mubr.f32.mxu0 0.0
    %202 = vmatmul.mubr.f32.gmra.mxu0 %v54
    %v203 = vpop.f32.mrf.mxu0
    %v204 = vadd.f32 %v80, %v203
    %v205 = vpop.f32.mrf.mxu0
    %206 = vmatprep.mubr.f32.mxu0 0.0
    %207 = vmatmul.mubr.f32.gmra.mxu0 %v55
    %v208 = vpop.f32.mrf.mxu0
    %v209 = vadd.f32 %v80, %v208
    %v210 = vpop.f32.mrf.mxu0
    %211 = vmatprep.mubr.f32.mxu0 0.0
    %212 = vmatmul.mubr.f32.gmra.mxu0 %v56
    %v213 = vpop.f32.mrf.mxu0
    %v214 = vadd.f32 %v80, %v213
    %v215 = vpop.f32.mrf.mxu0
    %216 = vmatprep.mubr.f32.mxu0 0.0
    %217 = vmatmul.mubr.f32.gmra.mxu0 %v57
    %v218 = vpop.f32.mrf.mxu0
    %v219 = vadd.f32 %v80, %v218
    %v220 = vpop.f32.mrf.mxu0
    %221 = vmatprep.mubr.f32.mxu0 0.0
    %222 = vmatmul.mubr.f32.gmra.mxu0 %v58
    %v223 = vpop.f32.mrf.mxu0
    %v224 = vadd.f32 %v80, %v223
    %v225 = vpop.f32.mrf.mxu0
    %226 = vdwg.mxu0
    %vm227 = vcmp.ge.f32.partialorder %v149, 0.0
    %vm228 = vcmp.ge.f32.partialorder %v154, 0.0
    %vm229 = vcmp.ge.f32.partialorder %v159, 0.0
    %vm230 = vcmp.ge.f32.partialorder %v164, 0.0
    %vm231 = vcmp.ge.f32.partialorder %v169, 0.0
    %vm232 = vcmp.ge.f32.partialorder %v174, 0.0
    %vm233 = vcmp.ge.f32.partialorder %v179, 0.0
    %vm234 = vcmp.ge.f32.partialorder %v184, 0.0
    %vm235 = vcmp.ge.f32.partialorder %v189, 0.0
    %vm236 = vcmp.ge.f32.partialorder %v194, 0.0
    %vm237 = vcmp.ge.f32.partialorder %v199, 0.0
    %vm238 = vcmp.ge.f32.partialorder %v204, 0.0
    %vm239 = vcmp.ge.f32.partialorder %v209, 0.0
    %vm240 = vcmp.ge.f32.partialorder %v214, 0.0
    %vm241 = vcmp.ge.f32.partialorder %v219, 0.0
    %vm242 = vcmp.ge.f32.partialorder %v224, 0.0
    %v243 = vmul.f32 %v149, 0.2
    %v244 = vmul.f32 %v154, 0.2
    %v245 = vmul.f32 %v159, 0.2
    %v246 = vmul.f32 %v164, 0.2
    %v247 = vmul.f32 %v169, 0.2
    %v248 = vmul.f32 %v174, 0.2
    %v249 = vmul.f32 %v179, 0.2
    %v250 = vmul.f32 %v184, 0.2
    %v251 = vmul.f32 %v189, 0.2
    %v252 = vmul.f32 %v194, 0.2
    %v253 = vmul.f32 %v199, 0.2
    %v254 = vmul.f32 %v204, 0.2
    %v255 = vmul.f32 %v209, 0.2
    %v256 = vmul.f32 %v214, 0.2
    %v257 = vmul.f32 %v219, 0.2
    %v258 = vmul.f32 %v224, 0.2
    %v259 = vsel %vm227, %v149, %v243
    %v260 = vsel %vm228, %v154, %v244
    %v261 = vsel %vm229, %v159, %v245
    %v262 = vsel %vm230, %v164, %v246
    %v263 = vsel %vm231, %v169, %v247
    %v264 = vsel %vm232, %v174, %v248
    %v265 = vsel %vm233, %v179, %v249
    %v266 = vsel %vm234, %v184, %v250
    %v267 = vsel %vm235, %v189, %v251
    %v268 = vsel %vm236, %v194, %v252
    %v269 = vsel %vm237, %v199, %v253
    %v270 = vsel %vm238, %v204, %v254
    %v271 = vsel %vm239, %v209, %v255
    %v272 = vsel %vm240, %v214, %v256
    %v273 = vsel %vm241, %v219, %v257
    %v274 = vsel %vm242, %v224, %v258
    %v275 = vpack.c.bf16 %v260, %v259
    %v276 = vpack.c.bf16 %v262, %v261
    %v277 = vpack.c.bf16 %v264, %v263
    %v278 = vpack.c.bf16 %v266, %v265
    %v279 = vpack.c.bf16 %v268, %v267
    %v280 = vpack.c.bf16 %v270, %v269
    %v281 = vpack.c.bf16 %v272, %v271
    %v282 = vpack.c.bf16 %v274, %v273
    %v291 = vunpack.c.l.b16 %v275
    %v292 = vunpack.c.h.b16 %v275
    %v293 = vunpack.c.l.b16 %v276
    %v294 = vunpack.c.h.b16 %v276
    %v295 = vunpack.c.l.b16 %v277
    %v296 = vunpack.c.h.b16 %v277
    %v297 = vunpack.c.l.b16 %v278
    %v298 = vunpack.c.h.b16 %v278
    %v299 = vunpack.c.l.b16 %v279
    %v300 = vunpack.c.h.b16 %v279
    %v301 = vunpack.c.l.b16 %v280
    %v302 = vunpack.c.h.b16 %v280
    %v303 = vunpack.c.l.b16 %v281
    %v304 = vunpack.c.h.b16 %v281
    %v305 = vunpack.c.l.b16 %v282
    %v306 = vunpack.c.h.b16 %v282
    %v307 = vpack.c.b16 %v291, %v291
    %v308 = vpack.c.b16 %v292, %v292
    %v309 = vpack.c.b16 %v293, %v293
    %v310 = vpack.c.b16 %v294, %v294
    %v311 = vpack.c.b16 %v295, %v295
    %v312 = vpack.c.b16 %v296, %v296
    %v313 = vpack.c.b16 %v297, %v297
    %v314 = vpack.c.b16 %v298, %v298
    %v315 = vpack.c.b16 %v299, %v299
    %v316 = vpack.c.b16 %v300, %v300
    %v317 = vpack.c.b16 %v301, %v301
    %v318 = vpack.c.b16 %v302, %v302
    %v319 = vpack.c.b16 %v303, %v303
    %v320 = vpack.c.b16 %v304, %v304
    %v321 = vpack.c.b16 %v305, %v305
    %v322 = vpack.c.b16 %v306, %v306
    %339 = vst [vmem:[#allocation7] sm:$0xf] %v307
    %340 = vst [vmem:[#allocation7 + $0x4] sm:$0xf] %v308
    %341 = vst [vmem:[#allocation7 + $0x8] sm:$0xf] %v309
    %342 = vst [vmem:[#allocation7 + $0xc] sm:$0xf] %v310
    %343 = vst [vmem:[#allocation7 + $0x10] sm:$0xf] %v311
    %344 = vst [vmem:[#allocation7 + $0x14] sm:$0xf] %v312
    %345 = vst [vmem:[#allocation7 + $0x18] sm:$0xf] %v313
    %346 = vst [vmem:[#allocation7 + $0x1c] sm:$0xf] %v314
    %347 = vst [vmem:[#allocation7 + $0x20] sm:$0xf] %v315
    %348 = vst [vmem:[#allocation7 + $0x24] sm:$0xf] %v316
    %349 = vst [vmem:[#allocation7 + $0x28] sm:$0xf] %v317
    %350 = vst [vmem:[#allocation7 + $0x2c] sm:$0xf] %v318
    %351 = vst [vmem:[#allocation7 + $0x30] sm:$0xf] %v319
    %352 = vst [vmem:[#allocation7 + $0x34] sm:$0xf] %v320
    %353 = vst [vmem:[#allocation7 + $0x38] sm:$0xf] %v321
    %354 = vst [vmem:[#allocation7 + $0x3c] sm:$0xf] %v322
    // Predicated region
    $region22: #{tpu_custom_call.1} parent=1 // pred_check
      _
    $region23: #{tpu_custom_call.1} parent=1 // pred_check_branch
      %356 = sbr.rel (0) target = $region25
    $region24: #{tpu_custom_call.1} parent=1 // pred_region
      %s358 = ssub.s32 1024, 1024
      %359 = vsyncadd [#allocation4], %s358
      %s360 = sshll.u32 [#allocation7], 4
      %s361 = int_to_ptr.vmem [resolvable:$true] %s360
      %366 = dma.vmem_to_hbm [thread:$0]  %s361, 1024, %s3, [#allocation4], 64, 64, 4
    $region25: #{tpu_custom_call.1} parent=1 // pred_fallthru
      _
    // Predicated region
    $region26: #{tpu_custom_call.1} parent=1 // pred_check
      _
    $region27: #{tpu_custom_call.1} parent=1 // pred_check_branch
      %368 = sbr.rel (0) target = $region29
    $region28: #{tpu_custom_call.1} parent=1 // pred_region
      %369 = dma.done [#allocation4], 1024
    $region29: #{tpu_custom_call.1} parent=1 // pred_fallthru
      _
    %370 = vsyncpa [#allocation3], 1
    %371 = vsyncpa [#allocation6], 1
    %372 = vsyncpa [#allocation4], 1

</llo_original>
